<compile_context>
chip_gen: v7x
topology: tpu7x:2x2x1
jax: 0.10.0
libtpu: 0.0.40
codegen_flags: <defaults>
</compile_context>

<pallas_src>
import functools

import jax
import jax.numpy as jnp
from jax.experimental import pallas as pl
from jax.experimental.pallas import tpu as pltpu


# ----------------------------------------------------------------------------
# ROPE_INIT_FUNCTIONS['default'] equivalent
# ----------------------------------------------------------------------------
def default_rope_init(head_dim: int, rope_theta: float):
    exponents = jnp.arange(0, head_dim, 2, dtype=jnp.float32) / float(head_dim)
    inv_freq = 1.0 / (rope_theta ** exponents)          # [head_dim // 2]
    attention_scaling = 1.0                              # default rope: no scaling
    return inv_freq, attention_scaling


# ----------------------------------------------------------------------------
# Pallas kernel: one grid step per (batch row, row tile)
# ----------------------------------------------------------------------------
def _rope_kernel(pos_ref, e_ref, cos_ref, sin_ref, *, attention_scaling, use_dot):
    # pos_ref: (1, TR, fold_pad) f32 -- clamped positions, `fold` per folded row
    # e_ref  : (fold_pad, L)     f32 -- expansion * inv_freq matrix (constant)
    # cos_ref/sin_ref: (1, TR, L) out dtype (lane-dense when L == 128)
    p = pos_ref[0]                                       # (TR, fold_pad)
    e = e_ref[...]                                       # (fold_pad, L)

    if use_dot:
        # freqs[r, f*D + c] = p[r, f] * inv_freq[c % half]  — done on the MXU.
        freqs = jnp.dot(p, e, preferred_element_type=jnp.float32)   # (TR, L)
    else:
        # fold == 1: simple outer-product broadcast, (TR, 1) * (1, L).
        freqs = p * e

    cos = jnp.cos(freqs)
    sin = jnp.sin(freqs)
    if attention_scaling != 1.0:                         # static: skipped for default rope
        cos = cos * attention_scaling
        sin = sin * attention_scaling

    cos_ref[0] = cos.astype(cos_ref.dtype)
    sin_ref[0] = sin.astype(sin_ref.dtype)


# ----------------------------------------------------------------------------
# Wrapper helpers
# ----------------------------------------------------------------------------
def _choose_row_tile(num_rows: int, cap: int = 4096):
    """Return (TR, R_pad). TR <= cap, TR multiple of 8 (or == R_pad), TR | R_pad."""
    if num_rows <= cap:
        return num_rows, num_rows
    start = cap - (cap % 8)
    for tr in range(start, 255, -8):                     # don't accept tiny tiles
        if num_rows % tr == 0:
            return tr, num_rows
    tr = start
    r_pad = ((num_rows + tr - 1) // tr) * tr             # pad; tail sliced off later
    return tr, r_pad


def _apply_group_ranges(position_ids, batch, seq_len, group_ranges):
    """torch: updated_pos_ids[i, mask] = st — done on integer positions in plain JAX."""
    pos = jnp.broadcast_to(position_ids, (batch, seq_len))
    if group_ranges is None:
        return pos
    rows = []
    for i in range(batch):
        row = pos[i]
        if i < len(group_ranges):
            for st, ed in group_ranges[i]:
                m = (row >= st) & (row <= ed)
                row = jnp.where(m, jnp.asarray(st, row.dtype), row)
        rows.append(row)
    return jnp.stack(rows, axis=0)


# ----------------------------------------------------------------------------
# Wrapper (== MyLlamaRotaryEmbedding.forward)
# ----------------------------------------------------------------------------
def llama_rotary_embedding(x, position_ids, inv_freq, attention_scaling,
                           group_ranges):
    B, S, _ = x.shape
    half = inv_freq.shape[0]
    D = 2 * half
    out_dtype = x.dtype

    # Clamp on int positions (exact), then cast to float32 for the angle math.
    pos = _apply_group_ranges(position_ids, B, S, group_ranges).astype(jnp.float32)

    # Lane-dense folding: pack `fold` consecutive positions per 128-lane row
    # when head_dim < 128; fold == 1 falls back to the natural (S, D) layout.
    if D <= 128 and 128 % D == 0:
        fold = 128 // D
    else:
        fold = 1
    L = fold * D

    # inv_full[c] = inv_freq[c % half]  (the cat(freqs, freqs) pattern).
    inv_full = jnp.concatenate([inv_freq, inv_freq]).astype(jnp.float32)   # (D,)

    if fold == 1:
        fold_pad = 1
        E = inv_full.reshape(1, L)
    else:
        fold_pad = ((fold + 7) // 8) * 8                 # MXU-friendly contraction dim
        eye = jnp.eye(fold, dtype=jnp.float32)           # (fold, fold)
        E = (eye[:, :, None] * inv_full[None, None, :]).reshape(fold, L)
        if fold_pad != fold:
            E = jnp.pad(E, ((0, fold_pad - fold), (0, 0)))

    # Row tiling (rows of folded layout).
    R = (S + fold - 1) // fold
    TR, R_pad = _choose_row_tile(R)
    total = R_pad * fold

    if total != S:
        pos = jnp.pad(pos, ((0, 0), (0, total - S)))     # pad positions with zeros
    pos_folded = pos.reshape(B, R_pad, fold)
    if fold_pad != fold:
        pos_folded = jnp.pad(pos_folded, ((0, 0), (0, 0), (0, fold_pad - fold)))

    grid = (B, R_pad // TR)

    kernel = functools.partial(
        _rope_kernel,
        attention_scaling=float(attention_scaling),
        use_dot=(fold > 1),
    )

    cos_f, sin_f = pl.pallas_call(
        kernel,
        out_shape=(jax.ShapeDtypeStruct((B, R_pad, L), out_dtype),
                   jax.ShapeDtypeStruct((B, R_pad, L), out_dtype)),
        grid_spec=pltpu.PrefetchScalarGridSpec(
            num_scalar_prefetch=0,
            grid=grid,
            in_specs=[
                pl.BlockSpec((1, TR, fold_pad), lambda b, r: (b, r, 0)),
                pl.BlockSpec((fold_pad, L), lambda b, r: (0, 0)),
            ],
            out_specs=[
                pl.BlockSpec((1, TR, L), lambda b, r: (b, r, 0)),
                pl.BlockSpec((1, TR, L), lambda b, r: (b, r, 0)),
            ],
        ),
        compiler_params=pltpu.CompilerParams(
            dimension_semantics=("parallel", "parallel"),
            vmem_limit_bytes=32 * 1024 * 1024,
        ),
    )(pos_folded, E)

    # Free row-major reshape back to the module's [B, S, head_dim] layout
    # (slice is a no-op when no padding was needed).
    cos = cos_f.reshape(B, R_pad * fold, D)[:, :S]
    sin = sin_f.reshape(B, R_pad * fold, D)[:, :S]
    return cos, sin


# ----------------------------------------------------------------------------
# Pure-JAX reference (mirrors the PyTorch forward) for a sanity check
# ----------------------------------------------------------------------------
def reference(x, position_ids, inv_freq, attention_scaling, group_ranges):
    B, S, _ = x.shape
    pos = jnp.broadcast_to(position_ids, (B, S))
    rows = []
    for i in range(B):
        row = pos[i]
        if group_ranges is not None and i < len(group_ranges):
            for st, ed in group_ranges[i]:
                m = (row >= st) & (row <= ed)
                row = jnp.where(m, jnp.asarray(st, row.dtype), row)
        rows.append(row)
    pos = jnp.stack(rows, axis=0).astype(jnp.float32)
    freqs = pos[:, :, None] * inv_freq[None, None, :].astype(jnp.float32)
    emb = jnp.concatenate([freqs, freqs], axis=-1)
    cos = (jnp.cos(emb) * attention_scaling).astype(x.dtype)
    sin = (jnp.sin(emb) * attention_scaling).astype(x.dtype)
    return cos, sin


if __name__ == "__main__":
    def run_case(batch, seq_len, hidden, num_heads, rope_theta, group_ranges, seed):
        head_dim = hidden // num_heads
        inv_freq, attention_scaling = default_rope_init(head_dim, rope_theta)

        key = jax.random.PRNGKey(seed)
        x = jax.random.normal(key, (batch, seq_len, hidden), dtype=jnp.float32)
        position_ids = jnp.arange(seq_len, dtype=jnp.int32)[None, :]   # [1, S]

        cos, sin = llama_rotary_embedding(
            x, position_ids, inv_freq, attention_scaling, group_ranges)
        cos = jax.block_until_ready(cos)
        sin = jax.block_until_ready(sin)

        cos_ref, sin_ref = reference(
            x, position_ids, inv_freq, attention_scaling, group_ranges)

        assert cos.shape == (batch, seq_len, head_dim)
        assert sin.shape == (batch, seq_len, head_dim)
        assert cos.dtype == x.dtype and sin.dtype == x.dtype
        assert jnp.allclose(cos, cos_ref, atol=2e-3, rtol=2e-3)
        assert jnp.allclose(sin, sin_ref, atol=2e-3, rtol=2e-3)

    # config consistent with the module defaults (head_dim=16, group_ranges=[[(0,1)]])
    run_case(batch=2, seq_len=8, hidden=64, num_heads=4,
             rope_theta=10000.0, group_ranges=[[(0, 1)]], seed=0)
    # fold=2 (head_dim=64), multiple row blocks
    run_case(batch=2, seq_len=256, hidden=256, num_heads=4,
             rope_theta=10000.0, group_ranges=[[(0, 1)]], seed=0)
    # seq_len not a multiple of fold -> exercises the pad/slice path
    run_case(batch=1, seq_len=12, hidden=32, num_heads=2,
             rope_theta=10000.0, group_ranges=[[(0, 3)]], seed=0)
    # head_dim=128 -> fold=1 broadcast path, no MXU expansion
    run_case(batch=1, seq_len=16, hidden=512, num_heads=4,
             rope_theta=10000.0, group_ranges=None, seed=0)

    print("KERNEL_OK")
</pallas_src>

<mosaic_0001>
module attributes {stable_mosaic.version = 11 : i64} {
  func.func @_rope_kernel(%arg0: i32, %arg1: i32, %arg2: memref<1x1x8xf32, #tpu.memory_space<vmem>>, %arg3: memref<8x128xf32, #tpu.memory_space<vmem>>, %arg4: memref<1x1x128xf32, #tpu.memory_space<vmem>>, %arg5: memref<1x1x128xf32, #tpu.memory_space<vmem>>) attributes {dimension_semantics = [#tpu.dimension_semantics<parallel>, #tpu.dimension_semantics<parallel>], iteration_bounds = array<i64: 2, 1>, scalar_prefetch = 0 : i64, scratch_operands = 0 : i64, tpu.core_type = #tpu.core_type<tc>, window_params = [{transform_indices = @transform_0, window_bounds = array<i64: 1, 1, 8>}, {pipeline_mode = #tpu.pipeline_mode<synchronous>, transform_indices = @transform_1, window_bounds = array<i64: 8, 128>}, {transform_indices = @transform_2, window_bounds = array<i64: 1, 1, 128>}, {transform_indices = @transform_3, window_bounds = array<i64: 1, 1, 128>}]} {
    %c0 = arith.constant 0 : index
    %c0_0 = arith.constant 0 : index
    %c0_1 = arith.constant 0 : index
    %0 = vector.load %arg2[%c0, %c0_0, %c0_1] : memref<1x1x8xf32, #tpu.memory_space<vmem>>, vector<1x1x8xf32>
    %1 = vector.shape_cast %0 : vector<1x1x8xf32> to vector<1x8xf32>
    %c0_2 = arith.constant 0 : index
    %c0_3 = arith.constant 0 : index
    %2 = vector.load %arg3[%c0_2, %c0_3] : memref<8x128xf32, #tpu.memory_space<vmem>>, vector<8x128xf32>
    %cst = arith.constant dense<0.000000e+00> : vector<1x128xf32>
    %3 = tpu.matmul %1, %2, %cst {dimension_numbers = #tpu.dot_dimension_numbers<[1], [0], [0], [1], [0, 0, 1, 1], [], []>} : vector<1x8xf32>, vector<8x128xf32>, vector<1x128xf32> -> vector<1x128xf32>
    %4 = math.cos %3 : vector<1x128xf32>
    %5 = math.sin %3 : vector<1x128xf32>
    %c0_4 = arith.constant 0 : index
    %c0_5 = arith.constant 0 : index
    %c0_6 = arith.constant 0 : index
    %6 = vector.load %arg4[%c0_4, %c0_5, %c0_6] : memref<1x1x128xf32, #tpu.memory_space<vmem>>, vector<1x1x128xf32>
    %7 = vector.shape_cast %6 : vector<1x1x128xf32> to vector<1x128xf32>
    %8 = vector.shape_cast %4 : vector<1x128xf32> to vector<1x1x128xf32>
    tpu.vector_store %arg4[%c0_4, %c0_5, %c0_6], %8 {strides = array<i32>} : memref<1x1x128xf32, #tpu.memory_space<vmem>>, vector<1x1x128xf32>,
    %c0_7 = arith.constant 0 : index
    %c0_8 = arith.constant 0 : index
    %c0_9 = arith.constant 0 : index
    %9 = vector.load %arg5[%c0_7, %c0_8, %c0_9] : memref<1x1x128xf32, #tpu.memory_space<vmem>>, vector<1x1x128xf32>
    %10 = vector.shape_cast %9 : vector<1x1x128xf32> to vector<1x128xf32>
    %11 = vector.shape_cast %5 : vector<1x128xf32> to vector<1x1x128xf32>
    tpu.vector_store %arg5[%c0_7, %c0_8, %c0_9], %11 {strides = array<i32>} : memref<1x1x128xf32, #tpu.memory_space<vmem>>, vector<1x1x128xf32>,
    return
  }
  func.func @transform_0(%arg0: i32, %arg1: i32) -> (i32, i32, i32) {
    %c0_i32 = arith.constant 0 : i32
    %c0_i32_0 = arith.constant 0 : i32
    return %arg0, %arg1, %c0_i32 : i32, i32, i32
  }
  func.func @transform_1(%arg0: i32, %arg1: i32) -> (i32, i32) {
    %c0_i32 = arith.constant 0 : i32
    %c0_i32_0 = arith.constant 0 : i32
    %c0_i32_1 = arith.constant 0 : i32
    return %c0_i32, %c0_i32_0 : i32, i32
  }
  func.func @transform_2(%arg0: i32, %arg1: i32) -> (i32, i32, i32) {
    %c0_i32 = arith.constant 0 : i32
    %c0_i32_0 = arith.constant 0 : i32
    return %arg0, %arg1, %c0_i32 : i32, i32, i32
  }
  func.func @transform_3(%arg0: i32, %arg1: i32) -> (i32, i32, i32) {
    %c0_i32 = arith.constant 0 : i32
    %c0_i32_0 = arith.constant 0 : i32
    return %arg0, %arg1, %c0_i32 : i32, i32, i32
  }
}

</mosaic_0001>

<llo_original>
// kernel: tpu_custom_call.1
$region0: #{tpu_custom_call.1}
  #allocation0 [shape = 'u32[]', space=smem, size = 0x4, offset = 0x4, fixed_abs, tag = 'smem constant byte address 0x4 - core index']
  #allocation1 [shape = 'u32[144,128]{1,0:T(1,128)}', space=vmem, size = 0x12000, scoped, tag = 'internal scratch']
  %s0 = inlined_call_operand.hbm [shape: f32[2,1,8], index: 0, kind: input, shape index: {}]
  %s1 = inlined_call_operand.hbm [shape: f32[8,128], index: 1, kind: input, shape index: {}]
  %s2 = inlined_call_operand.hbm [shape: f32[2,1,128], index: 2, kind: output, shape index: {0}]
  %s3 = inlined_call_operand.hbm [shape: f32[2,1,128], index: 3, kind: output, shape index: {1}]
  %4 = xla_tuple %s2, %s3
  %s5 = sld [smem:[#allocation0]]
  $region57: #{tpu_custom_call.1} parent=0
    _
  %s7 = ssub.s32 1, %s5
  %s8 = scalar_select 0, %s7, %s5
  $region1: #{tpu_custom_call.1} parent=0
    #allocation2 [shape = 'u8[1024]{0}', space=vmem, size = 0x400, scoped, tag = 'input window, operand 0']
    #allocation3 [shape = 's32[2]{0}', space=sflag, size = 0x8, scoped, tag = 'scoped memory for tpu_custom_call.1']
    #allocation4 [shape = 's32[2]{0}', space=sflag, size = 0x8, scoped, tag = 'scoped memory for tpu_custom_call.1']
    #allocation5 [shape = 'u8[4096]{0}', space=vmem, size = 0x1000, scoped, tag = 'input window, operand 1, single buffered']
    #allocation6 [shape = 's32[1]{0}', space=sflag, size = 0x4, scoped, tag = 'scoped memory for tpu_custom_call.1']
    #allocation7 [shape = 'u8[1024]{0}', space=vmem, size = 0x400, scoped, tag = 'output window, operand 0']
    #allocation8 [shape = 'u8[1024]{0}', space=vmem, size = 0x400, scoped, tag = 'output window, operand 1']
    #allocation9 [shape = 's32[2]{0}', space=sflag, size = 0x8, scoped, tag = 'scoped memory for tpu_custom_call.1']
    %9 = vsyncpa [#allocation3], 0
    %s10 = scalar_lea.sflag [#allocation3], 1
    %11 = vsyncpa %s10, 0
    %12 = vsyncpa [#allocation6], 0
    %13 = vsyncpa [#allocation4], 0
    %s14 = scalar_lea.sflag [#allocation4], 1
    %15 = vsyncpa %s14, 0
    %16 = vsyncpa [#allocation9], 0
    %s17 = scalar_lea.sflag [#allocation9], 1
    %18 = vsyncpa %s17, 0
    loop: start=0, step=1, limit=4
    $region2: #{tpu_custom_call.1} parent=1 // loop_pre_header
      _
    $region3: #{tpu_custom_call.1} parent=1 // loop_header
      %s20 = sphi 0, %s24
      %p21 = scmp.ge.s32.totalorder %s20, 4
      %s27 = sphi 0, %s39
      %s28 = sphi 0, %s35
      %s29 = sphi 0, %s27
      %s30 = sphi 0, %s28
      %s31 = sphi 0, %s29
      %s32 = sphi 0, %s30
      %s44 = sphi 0, %s46
      %s47 = sphi 0, %s44
      %s48 = sphi 0, %s47
      %s64 = sphi 0, %s48
      %s68 = sphi 0, %s68
      %s70 = sphi 0, %s68
      %s71 = sphi 0, %s70
      %s85 = sphi 0, %s71
      %s93 = sphi 0, %s95
      %s96 = sphi 0, %s93
      %s97 = sphi 0, %s96
      %s113 = sphi 0, %s97
      %s121 = sphi 0, %s123
      %s124 = sphi 0, %s121
      %s125 = sphi 0, %s124
      %s141 = sphi 0, %s125
    $region4: #{tpu_custom_call.1} parent=1 // loop_header_branch
      %23 = sbr.rel (%p21) target = $region8
    $region5: #{tpu_custom_call.1} parent=1 // loop_body
      %s25 = ssub.s32 %s20, 1
      %s26 = ssub.s32 %s20, 2
      %s33 = sadd.s32 1, %s28
      %p34 = scmp.ge.s32.totalorder %s33, 1
      %s35 = scalar_select %p34, 0, %s33
      %s36 = sadd.s32 1, %s27
      %s37 = scalar_select %p34, %s36, %s27
      %p38 = scmp.ge.s32.totalorder %s37, 2
      %s39 = scalar_select %p38, 0, %s37
      %s40 = ssub.s32 %s27, %s39
      %s41 = ssub.s32 %s28, %s35
      %s42 = sor.u32 %s40, %s41
      %p43 = scmp.eq.s32.totalorder %s42, 0
      %s45 = sadd.s32 %s44, 1
      %s46 = scalar_select %p43, %s44, %s45
      %p49 = pneg %p43
      %p50 = scmp.eq.s32.totalorder %s20, 1
      %p51 = por %p49, %p50
      %p52 = scmp.ne.s32.totalorder %s44, %s47
      %p53 = scmp.eq.s32.totalorder %s20, 0
      %p54 = por %p52, %p53
      %p55 = scmp.ne.s32.totalorder %s44, %s47
      %p56 = scmp.eq.s32.totalorder %s25, 1
      %p57 = por %p55, %p56
      %p58 = scmp.ne.s32.totalorder %s47, %s48
      %p59 = scmp.eq.s32.totalorder %s25, 0
      %p60 = por %p58, %p59
      %p61 = scmp.ne.s32.totalorder %s47, %s48
      %p62 = scmp.eq.s32.totalorder %s26, 1
      %p63 = por %p61, %p62
      %p65 = scmp.ne.s32.totalorder %s48, %s64
      %p66 = scmp.eq.s32.totalorder %s26, 0
      %p67 = por %p65, %p66
      %s69 = sadd.s32 %s68, 1
      %p72 = scmp.eq.s32.totalorder %s20, 1
      %p73 = scmp.ne.s32.totalorder %s68, %s70
      %p74 = scmp.eq.s32.totalorder %s20, 0
      %p75 = por %p73, %p74
      %p76 = scmp.ne.s32.totalorder %s68, %s70
      %p77 = scmp.eq.s32.totalorder %s25, 1
      %p78 = por %p76, %p77
      %p79 = scmp.ne.s32.totalorder %s70, %s71
      %p80 = scmp.eq.s32.totalorder %s25, 0
      %p81 = por %p79, %p80
      %p82 = scmp.ne.s32.totalorder %s70, %s71
      %p83 = scmp.eq.s32.totalorder %s26, 1
      %p84 = por %p82, %p83
      %p86 = scmp.ne.s32.totalorder %s71, %s85
      %p87 = scmp.eq.s32.totalorder %s26, 0
      %p88 = por %p86, %p87
      %s89 = ssub.s32 %s27, %s39
      %s90 = ssub.s32 %s28, %s35
      %s91 = sor.u32 %s89, %s90
      %p92 = scmp.eq.s32.totalorder %s91, 0
      %s94 = sadd.s32 %s93, 1
      %s95 = scalar_select %p92, %s93, %s94
      %p98 = pneg %p92
      %p99 = scmp.eq.s32.totalorder %s20, 1
      %p100 = por %p98, %p99
      %p101 = scmp.ne.s32.totalorder %s93, %s96
      %p102 = scmp.eq.s32.totalorder %s20, 0
      %p103 = por %p101, %p102
      %p104 = scmp.ne.s32.totalorder %s93, %s96
      %p105 = scmp.eq.s32.totalorder %s25, 1
      %p106 = por %p104, %p105
      %p107 = scmp.ne.s32.totalorder %s96, %s97
      %p108 = scmp.eq.s32.totalorder %s25, 0
      %p109 = por %p107, %p108
      %p110 = scmp.ne.s32.totalorder %s96, %s97
      %p111 = scmp.eq.s32.totalorder %s26, 1
      %p112 = por %p110, %p111
      %p114 = scmp.ne.s32.totalorder %s97, %s113
      %p115 = scmp.eq.s32.totalorder %s26, 0
      %p116 = por %p114, %p115
      %s117 = ssub.s32 %s27, %s39
      %s118 = ssub.s32 %s28, %s35
      %s119 = sor.u32 %s117, %s118
      %p120 = scmp.eq.s32.totalorder %s119, 0
      %s122 = sadd.s32 %s121, 1
      %s123 = scalar_select %p120, %s121, %s122
      %p126 = pneg %p120
      %p127 = scmp.eq.s32.totalorder %s20, 1
      %p128 = por %p126, %p127
      %p129 = scmp.ne.s32.totalorder %s121, %s124
      %p130 = scmp.eq.s32.totalorder %s20, 0
      %p131 = por %p129, %p130
      %p132 = scmp.ne.s32.totalorder %s121, %s124
      %p133 = scmp.eq.s32.totalorder %s25, 1
      %p134 = por %p132, %p133
      %p135 = scmp.ne.s32.totalorder %s124, %s125
      %p136 = scmp.eq.s32.totalorder %s25, 0
      %p137 = por %p135, %p136
      %p138 = scmp.ne.s32.totalorder %s124, %s125
      %p139 = scmp.eq.s32.totalorder %s26, 1
      %p140 = por %p138, %p139
      %p142 = scmp.ne.s32.totalorder %s125, %s141
      %p143 = scmp.eq.s32.totalorder %s26, 0
      %p144 = por %p142, %p143
      %p145 = scmp.le.s32.totalorder 1, %s20
      %p146 = scmp.lt.s32.totalorder %s20, 3
      %p147 = pnand %p145, %p146
      %p148 = pneg %p147
      // Predicated region
      $region9: #{tpu_custom_call.1} parent=5 // pred_check
        _
      $region10: #{tpu_custom_call.1} parent=5 // pred_check_branch
        %150 = sbr.rel (%p147) target = $region12
      $region11: #{tpu_custom_call.1} parent=5 // pred_region
        %s151 = ssub.s32 %s20, 1
        // Predicated region
        $region13: #{tpu_custom_call.1} parent=11 // pred_check
          %p152 = pneg %p81
        $region14: #{tpu_custom_call.1} parent=11 // pred_check_branch
          %154 = sbr.rel (%p152) target = $region16
        $region15: #{tpu_custom_call.1} parent=11 // pred_region
          %s156 = ssub.s32 128, 128
          %157 = vsyncadd [#allocation6], %s156
          %s159 = sshll.u32 [#allocation5], 4
          %s160 = int_to_ptr.vmem [resolvable:$true] %s159
          %162 = dma.hbm_to_vmem [thread:$0]  %s1, 128, %s160, [#allocation6]
        $region16: #{tpu_custom_call.1} parent=11 // pred_fallthru
          _
      $region12: #{tpu_custom_call.1} parent=5 // pred_fallthru
        _
      %p163 = scmp.lt.s32.totalorder %s20, 2
      // Predicated region
      $region17: #{tpu_custom_call.1} parent=5 // pred_check
        %p164 = pneg %p163
      $region18: #{tpu_custom_call.1} parent=5 // pred_check_branch
        %166 = sbr.rel (%p164) target = $region20
      $region19: #{tpu_custom_call.1} parent=5 // pred_region
        // Predicated region
        $region21: #{tpu_custom_call.1} parent=19 // pred_check
          %p167 = pneg %p54
        $region22: #{tpu_custom_call.1} parent=19 // pred_check_branch
          %169 = sbr.rel (%p167) target = $region24
        $region23: #{tpu_custom_call.1} parent=19 // pred_region
          %s170 = sand.u32 %s44, 1
          %s171 = scalar_lea.sflag [#allocation3], %s170
          %s172 = sand.u32 %s44, 1
          %s173 = scalar_lea.vmem [#allocation2], %s172
          %s175 = ssub.s32 16, 16
          %176 = vsyncadd %s171, %s175
          %s177 = sadd.s32 %s28, %s27
          %s178 = smul.addr %s177, 16
          %s179 = scalar_lea.hbm %s0, %s178
          %s181 = sshll.u32 %s173, 4
          %s182 = int_to_ptr.vmem [resolvable:$true] %s181
          %184 = dma.hbm_to_vmem [thread:$0]  %s179, 16, %s182, %s171
        $region24: #{tpu_custom_call.1} parent=19 // pred_fallthru
          _
      $region20: #{tpu_custom_call.1} parent=5 // pred_fallthru
        _
      %p185 = scmp.le.s32.totalorder 1, %s20
      %p186 = scmp.lt.s32.totalorder %s20, 3
      %p187 = pnand %p185, %p186
      %p188 = pneg %p187
      // Predicated region
      $region25: #{tpu_custom_call.1} parent=5 // pred_check
        _
      $region26: #{tpu_custom_call.1} parent=5 // pred_check_branch
        %190 = sbr.rel (%p187) target = $region28
      $region27: #{tpu_custom_call.1} parent=5 // pred_region
        %s191 = ssub.s32 %s20, 1
        %s192 = sand.u32 %s47, 1
        %s193 = scalar_lea.sflag [#allocation3], %s192
        %s194 = sand.u32 %s47, 1
        %s195 = scalar_lea.vmem [#allocation2], %s194
        // Predicated region
        $region29: #{tpu_custom_call.1} parent=27 // pred_check
          %p196 = pneg %p60
        $region30: #{tpu_custom_call.1} parent=27 // pred_check_branch
          %198 = sbr.rel (%p196) target = $region32
        $region31: #{tpu_custom_call.1} parent=27 // pred_region
          %199 = dma.done %s193, 16
        $region32: #{tpu_custom_call.1} parent=27 // pred_fallthru
          _
        // Predicated region
        $region33: #{tpu_custom_call.1} parent=27 // pred_check
          %p200 = pneg %p81
        $region34: #{tpu_custom_call.1} parent=27 // pred_check_branch
          %202 = sbr.rel (%p200) target = $region36
        $region35: #{tpu_custom_call.1} parent=27 // pred_region
          %203 = dma.done [#allocation6], 128
        $region36: #{tpu_custom_call.1} parent=27 // pred_fallthru
          _
        %s204 = sand.u32 %s47, 1
        %s205 = scalar_lea.sflag [#allocation3], %s204
        %s206 = sand.u32 %s47, 1
        %s207 = scalar_lea.vmem [#allocation2], %s206
        %p208 = pneg %p60
        %p209 = pneg %p57
        %p210 = pneg %p81
        %p211 = pneg %p78
        %p212 = pneg %p109
        %p213 = pneg %p106
        %s214 = sand.u32 %s96, 1
        %s215 = scalar_lea.sflag [#allocation4], %s214
        %s216 = sand.u32 %s96, 1
        %s217 = scalar_lea.vmem [#allocation7], %s216
        %p218 = pneg %p137
        %p219 = pneg %p134
        %s220 = sand.u32 %s124, 1
        %s221 = scalar_lea.sflag [#allocation9], %s220
        %s222 = sand.u32 %s124, 1
        %s223 = scalar_lea.vmem [#allocation8], %s222
        %v224 = vld [vmem:[%s195] sm:$0x1]
        %v225 = vld [vmem:[#allocation5] sm:$0xff]
        %vm226 = vcmask 64512
        %v228 = vsel %vm226, %v224, 0
        %230 = vmatprep.subr.mxu0 0.0
        %231 = vmatpush1.msra.mxu0 %v225
        %232 = vmatprep.subr.mxu0 0.0
        %233 = vmatpush1.msra.mxu0 0.0
        %234 = vmatprep.subr.mxu0 0.0
        %235 = vmatpush1.msra.mxu0 0.0
        %236 = vmatprep.subr.mxu0 0.0
        %237 = vmatpush1.msra.mxu0 0.0
        %238 = vmatprep.subr.mxu0 0.0
        %239 = vmatpush1.msra.mxu0 0.0
        %240 = vmatprep.subr.mxu0 0.0
        %241 = vmatpush1.msra.mxu0 0.0
        %242 = vmatprep.subr.mxu0 0.0
        %243 = vmatpush1.msra.mxu0 0.0
        %244 = vmatprep.subr.mxu0 0.0
        %245 = vmatpush1.msra.mxu0 0.0
        %246 = vmatprep.subr.mxu0 0.0
        %247 = vmatpush1.msra.mxu0 0.0
        %248 = vmatprep.subr.mxu0 0.0
        %249 = vmatpush1.msra.mxu0 0.0
        %250 = vmatprep.subr.mxu0 0.0
        %251 = vmatpush1.msra.mxu0 0.0
        %252 = vmatprep.subr.mxu0 0.0
        %253 = vmatpush1.msra.mxu0 0.0
        %254 = vmatprep.subr.mxu0 0.0
        %255 = vmatpush1.msra.mxu0 0.0
        %256 = vmatprep.subr.mxu0 0.0
        %257 = vmatpush1.msra.mxu0 0.0
        %258 = vmatprep.subr.mxu0 0.0
        %259 = vmatpush1.msra.mxu0 0.0
        %260 = vmatprep.subr.mxu0 0.0
        %261 = vmatpush1.msra.mxu0 0.0
        %262 = vmatprep.subr.mxu0 0.0
        %263 = vmatpush1.msra.mxu0 0.0
        %264 = vmatprep.subr.mxu0 0.0
        %265 = vmatpush1.msra.mxu0 0.0
        %266 = vmatprep.subr.mxu0 0.0
        %267 = vmatpush1.msra.mxu0 0.0
        %268 = vmatprep.subr.mxu0 0.0
        %269 = vmatpush1.msra.mxu0 0.0
        %270 = vmatprep.subr.mxu0 0.0
        %271 = vmatpush1.msra.mxu0 0.0
        %272 = vmatprep.subr.mxu0 0.0
        %273 = vmatpush1.msra.mxu0 0.0
        %274 = vmatprep.subr.mxu0 0.0
        %275 = vmatpush1.msra.mxu0 0.0
        %276 = vmatprep.subr.mxu0 0.0
        %277 = vmatpush1.msra.mxu0 0.0
        %278 = vmatprep.subr.mxu0 0.0
        %279 = vmatpush1.msra.mxu0 0.0
        %280 = vmatprep.subr.mxu0 0.0
        %281 = vmatpush1.msra.mxu0 0.0
        %282 = vmatprep.subr.mxu0 0.0
        %283 = vmatpush1.msra.mxu0 0.0
        %284 = vmatprep.subr.mxu0 0.0
        %285 = vmatpush1.msra.mxu0 0.0
        %286 = vmatprep.subr.mxu0 0.0
        %287 = vmatpush1.msra.mxu0 0.0
        %288 = vmatprep.subr.mxu0 0.0
        %289 = vmatpush1.msra.mxu0 0.0
        %290 = vmatprep.subr.mxu0 0.0
        %291 = vmatpush1.msra.mxu0 0.0
        %292 = vmatprep.subr.mxu0 0.0
        %293 = vmatpush1.msra.mxu0 0.0
        %294 = vmatprep.mubr.f32.mxu0 0.0
        %295 = vmatmul.mubr.f32.gmra.mrb[0].mxu0 %v228
        %v296 = vpop.f32.mrb[0].mxu0
        %v297 = vadd.f32 0.0, %v296
        %v298 = vpop.f32.mrb[0].mxu0
        %299 = vdwg.mxu0
        %v300 = vand.u32 2147483647, %v297
        %vm301 = vcmp.le.f32.partialorder %v300, 0.7853982
        %vm302 = vcmp.lt.s32.totalorder %v297, 0
        %v303 = vand.u32 %v297, 2139095040
        %v304 = vshrl.u32 %v303, 23
        %v305 = vsub.s32 %v304, 127
        %v306 = vand.u32 2147483647, %v297
        %v307 = vand.u32 %v306, 8388607
        %v308 = vor.u32 %v307, 8388608
        %v309 = vsub.s32 0, %v308
        %v310 = vadd.s32 %v305, 1
        %vm311 = vcmp.gt.s32.totalorder %v310, 0
        %v312 = vsel %vm311, %v310, 0
        %v313 = vshrl.u32 %v312, 5
        %v314 = vand.u32 %v312, 31
        %v315 = vsub.s32 32, %v314
        %v316 = vshrl.u32 683565275, %v315
        %v317 = vshll.u32 683565275, %v314
        %v318 = vshrl.u32 2475754826, %v315
        %v319 = vor.u32 %v317, %v318
        %v320 = vshll.u32 2475754826, %v314
        %v321 = vshrl.u32 2131351028, %v315
        %v322 = vor.u32 %v320, %v321
        %v323 = vshll.u32 2131351028, %v314
        %v324 = vshrl.u32 2102212464, %v315
        %v325 = vor.u32 %v323, %v324
        %v326 = vshll.u32 2102212464, %v314
        %v327 = vshrl.u32 920167782, %v315
        %v328 = vor.u32 %v326, %v327
        %v329 = vshll.u32 920167782, %v314
        %v330 = vshrl.u32 1326507024, %v315
        %v331 = vor.u32 %v329, %v330
        %vm332 = vcmp.lt.s32.totalorder %v313, 1
        %vm333 = vcmp.lt.s32.totalorder %v313, 2
        %vm334 = vcmp.lt.s32.totalorder %v313, 3
        %vm335 = vcmp.lt.s32.totalorder %v313, 4
        %v336 = vsel %vm332, %v316, %v319
        %v337 = vsel %vm335, %v325, 2102212464
        %v338 = vsel %vm334, %v322, %v337
        %v339 = vsel %vm333, %v336, %v338
        %v340 = vsel %vm332, %v319, %v322
        %v341 = vsel %vm335, %v328, 920167782
        %v342 = vsel %vm334, %v325, %v341
        %v343 = vsel %vm333, %v340, %v342
        %v344 = vsel %vm332, %v322, %v325
        %v345 = vsel %vm335, %v331, 1326507024
        %v346 = vsel %vm334, %v328, %v345
        %v347 = vsel %vm333, %v344, %v346
        %v348 = vshll.u32 %v308, 8
        %v349 = vmul.u32.u64.compose %v348, %v347
        %v350 = vextract.low.u32 %v349
        %v351 = vextract.high.u32 %v349
        %v352 = vmul.u32.u64.compose %v348, %v343
        %v353 = vextract.low.u32 %v352
        %v354 = vextract.high.u32 %v352
        %v355 = vmul.u32 %v348, %v339
        %v356 = vadd.s32 %v351, %v353
        %vm357 = vc.u32 %v351, %v353
        %v358 = vadd.s32 %v354, 1
        %v359 = vsel %vm357, %v358, %v354
        %v360 = vadd.s32 %v355, %v359
        %v361 = vadd.s32 %v360, 536870912
        %v362 = vshrl.u32 %v361, 30
        %v363 = vshll.u32 %v362, 30
        %v364 = vsub.s32 %v360, %v363
        %vm365 = vcmp.lt.s32.totalorder %v364, 0
        %v366 = vsub.s32 0, %v364
        %v367 = vsel %vm365, %v366, %v364
        %v368 = vclz %v367
        %v369 = vsub.s32 %v368, 2
        %vm370 = vcmp.gt.s32.totalorder 0, %v369
        %v371 = vsel %vm370, 0, %v369
        %v372 = vsub.s32 32, %v371
        %v373 = vshll.u32 %v364, %v371
        %v374 = vshrl.u32 %v356, %v372
        %v375 = vor.u32 %v373, %v374
        %v376 = vsub.s32 4294967266, %v371
        %v377 = vadd.s32 %v376, 127
        %v378 = vshll.u32 %v377, 23
        %v379 = vor.u32 4788187, %v378
        %v380 = vand.u32 2147483647, %v379
        %v382 = vcvt.s32.f32 %v375
        %v383 = vmul.f32 %v382, %v380
        %v384 = vxor.u32 %v383, 2147483648
        %v385 = vsel %vm302, %v384, %v383
        %v386 = vsub.s32 4, %v362
        %v387 = vsel %vm302, %v386, %v362
        %v388 = vsel %vm301, %v297, %v385
        %v389 = vsel %vm301, 0, %v387
        %v390 = vcosq.f32.pop %v388
        %v391 = vsinq.f32.pop %v388
        %vm392 = vweird.f32 %v297
        %v393 = vand.u32 %v389, 3
        %vm394 = vcmp.lt.s32.totalorder %v393, 2
        %vm395 = vcmp.eq.s32.totalorder %v393, 0
        %v396 = vxor.u32 %v391, 2147483648
        %v397 = vsel %vm395, %v390, %v396
        %vm398 = vcmp.eq.s32.totalorder %v393, 2
        %v399 = vxor.u32 %v390, 2147483648
        %v400 = vsel %vm398, %v399, %v391
        %v401 = vsel %vm394, %v397, %v400
        %v402 = vsel %vm392, nan, %v401
        %v403 = vand.u32 2147483647, %v297
        %vm404 = vcmp.le.f32.partialorder %v403, 0.7853982
        %vm405 = vcmp.lt.s32.totalorder %v297, 0
        %v406 = vand.u32 %v297, 2139095040
        %v407 = vshrl.u32 %v406, 23
        %v408 = vsub.s32 %v407, 127
        %v409 = vand.u32 2147483647, %v297
        %v410 = vand.u32 %v409, 8388607
        %v411 = vor.u32 %v410, 8388608
        %v412 = vsub.s32 0, %v411
        %v413 = vadd.s32 %v408, 1
        %vm414 = vcmp.gt.s32.totalorder %v413, 0
        %v415 = vsel %vm414, %v413, 0
        %v416 = vshrl.u32 %v415, 5
        %v417 = vand.u32 %v415, 31
        %v418 = vsub.s32 32, %v417
        %v419 = vshrl.u32 683565275, %v418
        %v420 = vshll.u32 683565275, %v417
        %v421 = vshrl.u32 2475754826, %v418
        %v422 = vor.u32 %v420, %v421
        %v423 = vshll.u32 2475754826, %v417
        %v424 = vshrl.u32 2131351028, %v418
        %v425 = vor.u32 %v423, %v424
        %v426 = vshll.u32 2131351028, %v417
        %v427 = vshrl.u32 2102212464, %v418
        %v428 = vor.u32 %v426, %v427
        %v429 = vshll.u32 2102212464, %v417
        %v430 = vshrl.u32 920167782, %v418
        %v431 = vor.u32 %v429, %v430
        %v432 = vshll.u32 920167782, %v417
        %v433 = vshrl.u32 1326507024, %v418
        %v434 = vor.u32 %v432, %v433
        %vm435 = vcmp.lt.s32.totalorder %v416, 1
        %vm436 = vcmp.lt.s32.totalorder %v416, 2
        %vm437 = vcmp.lt.s32.totalorder %v416, 3
        %vm438 = vcmp.lt.s32.totalorder %v416, 4
        %v439 = vsel %vm435, %v419, %v422
        %v440 = vsel %vm438, %v428, 2102212464
        %v441 = vsel %vm437, %v425, %v440
        %v442 = vsel %vm436, %v439, %v441
        %v443 = vsel %vm435, %v422, %v425
        %v444 = vsel %vm438, %v431, 920167782
        %v445 = vsel %vm437, %v428, %v444
        %v446 = vsel %vm436, %v443, %v445
        %v447 = vsel %vm435, %v425, %v428
        %v448 = vsel %vm438, %v434, 1326507024
        %v449 = vsel %vm437, %v431, %v448
        %v450 = vsel %vm436, %v447, %v449
        %v451 = vshll.u32 %v411, 8
        %v452 = vmul.u32.u64.compose %v451, %v450
        %v453 = vextract.low.u32 %v452
        %v454 = vextract.high.u32 %v452
        %v455 = vmul.u32.u64.compose %v451, %v446
        %v456 = vextract.low.u32 %v455
        %v457 = vextract.high.u32 %v455
        %v458 = vmul.u32 %v451, %v442
        %v459 = vadd.s32 %v454, %v456
        %vm460 = vc.u32 %v454, %v456
        %v461 = vadd.s32 %v457, 1
        %v462 = vsel %vm460, %v461, %v457
        %v463 = vadd.s32 %v458, %v462
        %v464 = vadd.s32 %v463, 536870912
        %v465 = vshrl.u32 %v464, 30
        %v466 = vshll.u32 %v465, 30
        %v467 = vsub.s32 %v463, %v466
        %vm468 = vcmp.lt.s32.totalorder %v467, 0
        %v469 = vsub.s32 0, %v467
        %v470 = vsel %vm468, %v469, %v467
        %v471 = vclz %v470
        %v472 = vsub.s32 %v471, 2
        %vm473 = vcmp.gt.s32.totalorder 0, %v472
        %v474 = vsel %vm473, 0, %v472
        %v475 = vsub.s32 32, %v474
        %v476 = vshll.u32 %v467, %v474
        %v477 = vshrl.u32 %v459, %v475
        %v478 = vor.u32 %v476, %v477
        %v479 = vsub.s32 4294967266, %v474
        %v480 = vadd.s32 %v479, 127
        %v481 = vshll.u32 %v480, 23
        %v482 = vor.u32 4788187, %v481
        %v483 = vand.u32 2147483647, %v482
        %v485 = vcvt.s32.f32 %v478
        %v486 = vmul.f32 %v485, %v483
        %v487 = vxor.u32 %v486, 2147483648
        %v488 = vsel %vm405, %v487, %v486
        %v489 = vsub.s32 4, %v465
        %v490 = vsel %vm405, %v489, %v465
        %v491 = vsel %vm404, %v297, %v488
        %v492 = vsel %vm404, 0, %v490
        %v493 = vcosq.f32.pop %v491
        %v494 = vsinq.f32.pop %v491
        %vm495 = vweird.f32 %v297
        %v496 = vadd.s32 %v492, 3
        %v497 = vand.u32 %v496, 3
        %vm498 = vcmp.lt.s32.totalorder %v497, 2
        %vm499 = vcmp.eq.s32.totalorder %v497, 0
        %v500 = vxor.u32 %v494, 2147483648
        %v501 = vsel %vm499, %v493, %v500
        %vm502 = vcmp.eq.s32.totalorder %v497, 2
        %v503 = vxor.u32 %v493, 2147483648
        %v504 = vsel %vm502, %v503, %v494
        %v505 = vsel %vm498, %v501, %v504
        %v506 = vsel %vm495, nan, %v505
        %507 = vst [vmem:[%s217] sm:$0x1] %v402
        %508 = vst [vmem:[%s223] sm:$0x1] %v506
        %s509 = sand.u32 %s96, 1
        %s510 = scalar_lea.sflag [#allocation4], %s509
        %s511 = sand.u32 %s96, 1
        %s512 = scalar_lea.vmem [#allocation7], %s511
        %s513 = sand.u32 %s124, 1
        %s514 = scalar_lea.sflag [#allocation9], %s513
        %s515 = sand.u32 %s124, 1
        %s516 = scalar_lea.vmem [#allocation8], %s515
        // Predicated region
        $region37: #{tpu_custom_call.1} parent=27 // pred_check
          %p517 = pneg %p106
        $region38: #{tpu_custom_call.1} parent=27 // pred_check_branch
          %519 = sbr.rel (%p517) target = $region40
        $region39: #{tpu_custom_call.1} parent=27 // pred_region
          %s521 = ssub.s32 16, 16
          %522 = vsyncadd %s510, %s521
          %s523 = sadd.s32 %s30, %s29
          %s524 = smul.addr %s523, 16
          %s525 = scalar_lea.hbm %s2, %s524
          %s527 = sshll.u32 %s512, 4
          %s528 = int_to_ptr.vmem [resolvable:$true] %s527
          %530 = dma.vmem_to_hbm [thread:$0]  %s528, 16, %s525, %s510
        $region40: #{tpu_custom_call.1} parent=27 // pred_fallthru
          _
        // Predicated region
        $region41: #{tpu_custom_call.1} parent=27 // pred_check
          %p531 = pneg %p134
        $region42: #{tpu_custom_call.1} parent=27 // pred_check_branch
          %533 = sbr.rel (%p531) target = $region44
        $region43: #{tpu_custom_call.1} parent=27 // pred_region
          %s535 = ssub.s32 16, 16
          %536 = vsyncadd %s514, %s535
          %s537 = sadd.s32 %s30, %s29
          %s538 = smul.addr %s537, 16
          %s539 = scalar_lea.hbm %s3, %s538
          %s541 = sshll.u32 %s516, 4
          %s542 = int_to_ptr.vmem [resolvable:$true] %s541
          %544 = dma.vmem_to_hbm [thread:$0]  %s542, 16, %s539, %s514
        $region44: #{tpu_custom_call.1} parent=27 // pred_fallthru
          _
      $region28: #{tpu_custom_call.1} parent=5 // pred_fallthru
        _
      %p545 = scmp.le.s32.totalorder 2, %s20
      // Predicated region
      $region45: #{tpu_custom_call.1} parent=5 // pred_check
        %p546 = pneg %p545
      $region46: #{tpu_custom_call.1} parent=5 // pred_check_branch
        %548 = sbr.rel (%p546) target = $region48
      $region47: #{tpu_custom_call.1} parent=5 // pred_region
        %s549 = ssub.s32 %s20, 2
        // Predicated region
        $region49: #{tpu_custom_call.1} parent=47 // pred_check
          %p550 = pneg %p112
        $region50: #{tpu_custom_call.1} parent=47 // pred_check_branch
          %552 = sbr.rel (%p550) target = $region52
        $region51: #{tpu_custom_call.1} parent=47 // pred_region
          %s553 = sand.u32 %s97, 1
          %s554 = scalar_lea.sflag [#allocation4], %s553
          %s555 = sand.u32 %s97, 1
          %s556 = scalar_lea.vmem [#allocation7], %s555
          %557 = dma.done %s554, 16
        $region52: #{tpu_custom_call.1} parent=47 // pred_fallthru
          _
        // Predicated region
        $region53: #{tpu_custom_call.1} parent=47 // pred_check
          %p558 = pneg %p140
        $region54: #{tpu_custom_call.1} parent=47 // pred_check_branch
          %560 = sbr.rel (%p558) target = $region56
        $region55: #{tpu_custom_call.1} parent=47 // pred_region
          %s561 = sand.u32 %s125, 1
          %s562 = scalar_lea.sflag [#allocation9], %s561
          %s563 = sand.u32 %s125, 1
          %s564 = scalar_lea.vmem [#allocation8], %s563
          %565 = dma.done %s562, 16
        $region56: #{tpu_custom_call.1} parent=47 // pred_fallthru
          _
      $region48: #{tpu_custom_call.1} parent=5 // pred_fallthru
        _
    $region6: #{tpu_custom_call.1} parent=1 // loop_footer
      %s24 = sadd.s32 1, %s20
    $region7: #{tpu_custom_call.1} parent=1 // loop_footer_branch
      %19 = sbr.rel target = $region3
    $region8: #{tpu_custom_call.1} parent=1 // loop_exit
      _
    %566 = vsyncpa [#allocation3], 1
    %s567 = scalar_lea.sflag [#allocation3], 1
    %568 = vsyncpa %s567, 1
    %569 = vsyncpa [#allocation6], 1
    %570 = vsyncpa [#allocation4], 1
    %s571 = scalar_lea.sflag [#allocation4], 1
    %572 = vsyncpa %s571, 1
    %573 = vsyncpa [#allocation9], 1
    %s574 = scalar_lea.sflag [#allocation9], 1
    %575 = vsyncpa %s574, 1

</llo_original>
